<compile_context>
chip_gen: v6e
topology: v6e:2x2x1
jax: 0.10.0
libtpu: 0.0.40
codegen_flags: <defaults>
</compile_context>

<pallas_src>
import functools

import jax
import jax.numpy as jnp
from jax.experimental import pallas as pl
from jax.experimental.pallas import tpu as pltpu


def _ce2d_kernel(x_ref, t_ref, sum_ref, cnt_ref, acc_sum, acc_cnt, *,
                 s_total, tile_s, tiles_per_split):
    ci = pl.program_id(0)          # spatial split (v7x dual-TC parallelism)
    si = pl.program_id(2)          # spatial tile within split (reduction axis)

    @pl.when(si == 0)
    def _():
        acc_sum[...] = jnp.zeros_like(acc_sum)
        acc_cnt[...] = jnp.zeros_like(acc_cnt)

    x = x_ref[0].astype(jnp.float32)       # (C, TILE_S): C on sublanes, S on lanes
    t = t_ref[0]                           # (1, TILE_S) int32

    # Numerically stable log-sum-exp over the channel (sublane) axis.
    m = jnp.max(x, axis=0, keepdims=True)                                # (1, TILE_S)
    lse = jnp.log(jnp.sum(jnp.exp(x - m), axis=0, keepdims=True)) + m    # (1, TILE_S)

    # Gather x[target[col], col] via a sublane one-hot (no dynamic gather on TPU).
    # NOTE: targets are assumed to lie in [-inf, C); PyTorch raises for t >= C,
    # here such targets match no channel (picked_x = 0) yet still count as valid.
    ch = jax.lax.broadcasted_iota(jnp.int32, x.shape, 0)                 # (C, TILE_S)
    picked_x = jnp.sum(jnp.where(ch == t, x, 0.0), axis=0, keepdims=True)

    # Valid pixels: target >= 0 and lane inside the real spatial extent.
    # `col < rem` (single compare, no add) masks the Pallas-padded ragged tail
    # of the last tile; keep select-based masking (NaN/Inf-safe vs padded data).
    rem = s_total - (ci * tiles_per_split + si) * tile_s                 # scalar
    col = jax.lax.broadcasted_iota(jnp.int32, t.shape, 1)                # (1, TILE_S)
    valid = (t >= 0) & (col < rem)

    # Reduce this tile to scalars right away (XLU lane reduce -> (1,1)) and
    # accumulate in tiny VMEM cells: no wide accumulator vst/VALU stream.
    contrib = jnp.where(valid, picked_x - lse, 0.0)                      # (1, TILE_S)
    acc_sum[...] += jnp.sum(contrib, axis=1, keepdims=True)
    acc_cnt[...] += jnp.sum(valid.astype(jnp.float32), axis=1, keepdims=True)

    @pl.when(si == pl.num_programs(2) - 1)
    def _():
        sum_ref[0, 0] = acc_sum[...]
        cnt_ref[0, 0] = acc_cnt[...]


@functools.partial(jax.jit, static_argnames=("tile_s", "block_budget_bytes"))
def cross_entropy_loss_2d(x, target, tile_s=None,
                          block_budget_bytes=32 * 1024 * 1024):
    """x: (N, C, H, W) float, target: (N, H, W) int.
    Returns scalar f32 loss (mean NLL over pixels with target >= 0)."""
    n, c, h, w = x.shape
    s = h * w

    # Free reshapes only — stay in native NCHW memory order.
    xr = x.reshape(n, c, s)                                 # (N, C, S)
    tr = target.reshape(n, 1, s).astype(jnp.int32)          # (N, 1, S)

    s_pad = pl.cdiv(s, 128) * 128

    if tile_s is None:
        # Padding-aware auto-sizing of the double-buffered VMEM footprint:
        #   x block:   c padded to the dtype's sublane multiple (8/16/32)
        #   t block:   int32, sublane 1 -> 8
        #   everything x2 for pipelining.
        itemsize = jnp.dtype(x.dtype).itemsize
        sub = 8 * max(1, 4 // itemsize)           # f32 -> 8, bf16 -> 16, int8 -> 32
        c_pad = pl.cdiv(c, sub) * sub
        per_col_bytes = 2 * (c_pad * itemsize + 8 * 4)
        tile_s = max(128, (block_budget_bytes // per_col_bytes) // 128 * 128)
    else:
        # Enforce the 128-lane divisibility rule for user-supplied tiles.
        tile_s = max(128, (int(tile_s) // 128) * 128)
    tile_s = min(tile_s, s_pad)                   # don't exceed (padded) S

    num_s_tiles = pl.cdiv(s, tile_s)
    # Leading spatial split exposes parallelism for v7x's two TensorCores even
    # when N == 1 (no-op / single split on v5e / v6e or odd tile counts).
    splits = 2 if (num_s_tiles >= 2 and num_s_tiles % 2 == 0) else 1
    tiles_per_split = num_s_tiles // splits

    kernel = functools.partial(_ce2d_kernel, s_total=s, tile_s=tile_s,
                               tiles_per_split=tiles_per_split)

    psum, pcnt = pl.pallas_call(
        kernel,
        out_shape=(jax.ShapeDtypeStruct((splits, n, 1, 1), jnp.float32),
                   jax.ShapeDtypeStruct((splits, n, 1, 1), jnp.float32)),
        grid_spec=pltpu.PrefetchScalarGridSpec(
            num_scalar_prefetch=0,
            grid=(splits, n, tiles_per_split),
            in_specs=[
                pl.BlockSpec((1, c, tile_s),
                             lambda ci, ni, si: (ni, 0, ci * tiles_per_split + si)),
                pl.BlockSpec((1, 1, tile_s),
                             lambda ci, ni, si: (ni, 0, ci * tiles_per_split + si)),
            ],
            out_specs=[
                pl.BlockSpec((1, 1, 1, 1), lambda ci, ni, si: (ci, ni, 0, 0)),
                pl.BlockSpec((1, 1, 1, 1), lambda ci, ni, si: (ci, ni, 0, 0)),
            ],
            scratch_shapes=[
                pltpu.VMEM((1, 1), jnp.float32),   # running log-prob sum
                pltpu.VMEM((1, 1), jnp.float32),   # running valid-pixel count
            ],
        ),
        compiler_params=pltpu.CompilerParams(
            dimension_semantics=("parallel", "parallel", "arbitrary"),
            vmem_limit_bytes=48 * 1024 * 1024,
        ),
    )(xr, tr)

    # NLLLoss(weight=None, reduction='mean') over valid pixels.
    # (If no pixel is valid this yields NaN, matching PyTorch's mean reduction.)
    return -(jnp.sum(psum) / jnp.sum(pcnt))


def _reference_loss(x, target):
    n, c, h, w = x.shape
    log_p = jax.nn.log_softmax(x.astype(jnp.float32), axis=1)   # (N,C,H,W)
    log_p = jnp.transpose(log_p, (0, 2, 3, 1)).reshape(-1, c)   # (M,C)
    t = target.reshape(-1)
    valid = t >= 0
    picked = jnp.take_along_axis(log_p, jnp.clip(t, 0, c - 1)[:, None], axis=1)[:, 0]
    return -(jnp.sum(jnp.where(valid, picked, 0.0)) / jnp.sum(valid.astype(jnp.float32)))


if __name__ == "__main__":
    key = jax.random.PRNGKey(0)
    kx, kt = jax.random.split(key)

    N, C, H, W = 2, 4, 16, 16
    x = jax.random.normal(kx, (N, C, H, W), dtype=jnp.float32)
    # targets in [-1, C): -1 entries are ignored, matching `target >= 0` masking
    target = jax.random.randint(kt, (N, H, W), minval=-1, maxval=C, dtype=jnp.int32)

    loss = cross_entropy_loss_2d(x, target)
    loss = jax.block_until_ready(loss)

    ref = jax.block_until_ready(_reference_loss(x, target))
    assert jnp.allclose(loss, ref, rtol=1e-5, atol=1e-5), (loss, ref)

    print("KERNEL_OK")
</pallas_src>

<mosaic_0001>
module attributes {stable_mosaic.version = 11 : i64} {
  func.func @_ce2d_kernel(%arg0: i32, %arg1: i32, %arg2: i32, %arg3: memref<1x4x256xf32, #tpu.memory_space<vmem>>, %arg4: memref<1x1x256xi32, #tpu.memory_space<vmem>>, %arg5: memref<1x1x1x1xf32, #tpu.memory_space<vmem>>, %arg6: memref<1x1x1x1xf32, #tpu.memory_space<vmem>>, %arg7: memref<1x1xf32, #tpu.memory_space<vmem>>, %arg8: memref<1x1xf32, #tpu.memory_space<vmem>>) attributes {dimension_semantics = [#tpu.dimension_semantics<parallel>, #tpu.dimension_semantics<parallel>, #tpu.dimension_semantics<arbitrary>], iteration_bounds = array<i64: 1, 2, 1>, scalar_prefetch = 0 : i64, scratch_operands = 2 : i64, tpu.core_type = #tpu.core_type<tc>, window_params = [{transform_indices = @transform_0, window_bounds = array<i64: 1, 4, 256>}, {transform_indices = @transform_1, window_bounds = array<i64: 1, 1, 256>}, {transform_indices = @transform_2, window_bounds = array<i64: 1, 1, 1, 1>}, {transform_indices = @transform_3, window_bounds = array<i64: 1, 1, 1, 1>}]} {
    %c0_i32 = arith.constant 0 : i32
    %0 = arith.cmpi eq, %arg2, %c0_i32 : i32
    %1 = arith.extui %0 : i1 to i32
    %c0_i32_0 = arith.constant 0 : i32
    %2 = arith.cmpi ne, %1, %c0_i32_0 : i32
    scf.if %2 {
      %cst_24 = arith.constant 0.000000e+00 : f32
      %51 = vector.broadcast %cst_24 : f32 to vector<1x1xf32>
      %c0_25 = arith.constant 0 : index
      %c0_26 = arith.constant 0 : index
      %52 = vector.load %arg7[%c0_25, %c0_26] : memref<1x1xf32, #tpu.memory_space<vmem>>, vector<1x1xf32>
      tpu.vector_store %arg7[%c0_25, %c0_26], %51 {strides = array<i32>} : memref<1x1xf32, #tpu.memory_space<vmem>>, vector<1x1xf32>,
      %cst_27 = arith.constant 0.000000e+00 : f32
      %53 = vector.broadcast %cst_27 : f32 to vector<1x1xf32>
      %c0_28 = arith.constant 0 : index
      %c0_29 = arith.constant 0 : index
      %54 = vector.load %arg8[%c0_28, %c0_29] : memref<1x1xf32, #tpu.memory_space<vmem>>, vector<1x1xf32>
      tpu.vector_store %arg8[%c0_28, %c0_29], %53 {strides = array<i32>} : memref<1x1xf32, #tpu.memory_space<vmem>>, vector<1x1xf32>,
    } else {
    }
    %c0 = arith.constant 0 : index
    %c0_1 = arith.constant 0 : index
    %c0_2 = arith.constant 0 : index
    %3 = vector.load %arg3[%c0, %c0_1, %c0_2] : memref<1x4x256xf32, #tpu.memory_space<vmem>>, vector<1x4x256xf32>
    %4 = vector.shape_cast %3 : vector<1x4x256xf32> to vector<4x256xf32>
    %c0_3 = arith.constant 0 : index
    %c0_4 = arith.constant 0 : index
    %c0_5 = arith.constant 0 : index
    %5 = vector.load %arg4[%c0_3, %c0_4, %c0_5] : memref<1x1x256xi32, #tpu.memory_space<vmem>>, vector<1x1x256xi32>
    %6 = vector.shape_cast %5 : vector<1x1x256xi32> to vector<1x256xi32>
    %cst = arith.constant dense<0xFF800000> : vector<256xf32>
    %7 = vector.multi_reduction <maximumf>, %4, %cst [0] : vector<4x256xf32> to vector<256xf32>
    %8 = vector.shape_cast %7 : vector<256xf32> to vector<1x256xf32>
    %9 = vector.broadcast %8 : vector<1x256xf32> to vector<4x256xf32>
    %10 = arith.subf %4, %9 : vector<4x256xf32>
    %11 = math.exp %10 : vector<4x256xf32>
    %cst_6 = arith.constant dense<0.000000e+00> : vector<256xf32>
    %12 = vector.multi_reduction <add>, %11, %cst_6 [0] : vector<4x256xf32> to vector<256xf32>
    %13 = vector.shape_cast %12 : vector<256xf32> to vector<1x256xf32>
    %14 = math.log %13 : vector<1x256xf32>
    %15 = arith.addf %14, %8 : vector<1x256xf32>
    %16 = tpu.iota {dimensions = array<i32: 0>} : vector<4x256xi32>
    %17 = vector.broadcast %6 : vector<1x256xi32> to vector<4x256xi32>
    %18 = arith.cmpi eq, %16, %17 : vector<4x256xi32>
    %cst_7 = arith.constant 0.000000e+00 : f32
    %19 = vector.broadcast %cst_7 : f32 to vector<4x256xf32>
    %20 = arith.select %18, %4, %19 : vector<4x256xi1>, vector<4x256xf32>
    %cst_8 = arith.constant dense<0.000000e+00> : vector<256xf32>
    %21 = vector.multi_reduction <add>, %20, %cst_8 [0] : vector<4x256xf32> to vector<256xf32>
    %22 = vector.shape_cast %21 : vector<256xf32> to vector<1x256xf32>
    %c1_i32 = arith.constant 1 : i32
    %23 = arith.muli %arg0, %c1_i32 : i32
    %24 = arith.addi %23, %arg2 : i32
    %c256_i32 = arith.constant 256 : i32
    %25 = arith.muli %24, %c256_i32 : i32
    %c256_i32_9 = arith.constant 256 : i32
    %26 = arith.subi %c256_i32_9, %25 : i32
    %27 = tpu.iota {dimensions = array<i32: 1>} : vector<1x256xi32>
    %c0_i32_10 = arith.constant 0 : i32
    %28 = vector.broadcast %c0_i32_10 : i32 to vector<1x256xi32>
    %29 = arith.cmpi sge, %6, %28 : vector<1x256xi32>
    %30 = vector.broadcast %26 : i32 to vector<1x256xi32>
    %31 = arith.cmpi slt, %27, %30 : vector<1x256xi32>
    %32 = arith.andi %29, %31 : vector<1x256xi1>
    %33 = arith.subf %22, %15 : vector<1x256xf32>
    %cst_11 = arith.constant 0.000000e+00 : f32
    %34 = vector.broadcast %cst_11 : f32 to vector<1x256xf32>
    %35 = arith.select %32, %33, %34 : vector<1x256xi1>, vector<1x256xf32>
    %c0_12 = arith.constant 0 : index
    %c0_13 = arith.constant 0 : index
    %36 = vector.load %arg7[%c0_12, %c0_13] : memref<1x1xf32, #tpu.memory_space<vmem>>, vector<1x1xf32>
    %cst_14 = arith.constant dense<0.000000e+00> : vector<1xf32>
    %37 = vector.multi_reduction <add>, %35, %cst_14 [1] : vector<1x256xf32> to vector<1xf32>
    %38 = vector.shape_cast %37 : vector<1xf32> to vector<1x1xf32>
    %39 = arith.addf %36, %38 : vector<1x1xf32>
    %c0_15 = arith.constant 0 : index
    %c0_16 = arith.constant 0 : index
    %40 = vector.load %arg7[%c0_15, %c0_16] : memref<1x1xf32, #tpu.memory_space<vmem>>, vector<1x1xf32>
    tpu.vector_store %arg7[%c0_15, %c0_16], %39 {strides = array<i32>} : memref<1x1xf32, #tpu.memory_space<vmem>>, vector<1x1xf32>,
    %c0_17 = arith.constant 0 : index
    %c0_18 = arith.constant 0 : index
    %41 = vector.load %arg8[%c0_17, %c0_18] : memref<1x1xf32, #tpu.memory_space<vmem>>, vector<1x1xf32>
    %42 = arith.extui %32 : vector<1x256xi1> to vector<1x256xi32>
    %43 = arith.sitofp %42 : vector<1x256xi32> to vector<1x256xf32>
    %cst_19 = arith.constant dense<0.000000e+00> : vector<1xf32>
    %44 = vector.multi_reduction <add>, %43, %cst_19 [1] : vector<1x256xf32> to vector<1xf32>
    %45 = vector.shape_cast %44 : vector<1xf32> to vector<1x1xf32>
    %46 = arith.addf %41, %45 : vector<1x1xf32>
    %c0_20 = arith.constant 0 : index
    %c0_21 = arith.constant 0 : index
    %47 = vector.load %arg8[%c0_20, %c0_21] : memref<1x1xf32, #tpu.memory_space<vmem>>, vector<1x1xf32>
    tpu.vector_store %arg8[%c0_20, %c0_21], %46 {strides = array<i32>} : memref<1x1xf32, #tpu.memory_space<vmem>>, vector<1x1xf32>,
    %c0_i32_22 = arith.constant 0 : i32
    %48 = arith.cmpi eq, %arg2, %c0_i32_22 : i32
    %49 = arith.extui %48 : i1 to i32
    %c0_i32_23 = arith.constant 0 : i32
    %50 = arith.cmpi ne, %49, %c0_i32_23 : i32
    scf.if %50 {
      %c0_24 = arith.constant 0 : index
      %c0_25 = arith.constant 0 : index
      %51 = vector.load %arg7[%c0_24, %c0_25] : memref<1x1xf32, #tpu.memory_space<vmem>>, vector<1x1xf32>
      %c0_26 = arith.constant 0 : index
      %c0_27 = arith.constant 0 : index
      %c0_28 = arith.constant 0 : index
      %c0_29 = arith.constant 0 : index
      %52 = vector.load %arg5[%c0_26, %c0_27, %c0_28, %c0_29] : memref<1x1x1x1xf32, #tpu.memory_space<vmem>>, vector<1x1x1x1xf32>
      %53 = vector.shape_cast %52 : vector<1x1x1x1xf32> to vector<1x1xf32>
      %54 = vector.shape_cast %51 : vector<1x1xf32> to vector<1x1x1x1xf32>
      tpu.vector_store %arg5[%c0_26, %c0_27, %c0_28, %c0_29], %54 {strides = array<i32>} : memref<1x1x1x1xf32, #tpu.memory_space<vmem>>, vector<1x1x1x1xf32>,
      %c0_30 = arith.constant 0 : index
      %c0_31 = arith.constant 0 : index
      %55 = vector.load %arg8[%c0_30, %c0_31] : memref<1x1xf32, #tpu.memory_space<vmem>>, vector<1x1xf32>
      %c0_32 = arith.constant 0 : index
      %c0_33 = arith.constant 0 : index
      %c0_34 = arith.constant 0 : index
      %c0_35 = arith.constant 0 : index
      %56 = vector.load %arg6[%c0_32, %c0_33, %c0_34, %c0_35] : memref<1x1x1x1xf32, #tpu.memory_space<vmem>>, vector<1x1x1x1xf32>
      %57 = vector.shape_cast %56 : vector<1x1x1x1xf32> to vector<1x1xf32>
      %58 = vector.shape_cast %55 : vector<1x1xf32> to vector<1x1x1x1xf32>
      tpu.vector_store %arg6[%c0_32, %c0_33, %c0_34, %c0_35], %58 {strides = array<i32>} : memref<1x1x1x1xf32, #tpu.memory_space<vmem>>, vector<1x1x1x1xf32>,
    } else {
    }
    return
  }
  func.func @transform_0(%arg0: i32, %arg1: i32, %arg2: i32) -> (i32, i32, i32) {
    %c1_i32 = arith.constant 1 : i32
    %0 = arith.muli %arg0, %c1_i32 : i32
    %1 = arith.addi %0, %arg2 : i32
    %c0_i32 = arith.constant 0 : i32
    %c0_i32_0 = arith.constant 0 : i32
    return %arg1, %c0_i32, %1 : i32, i32, i32
  }
  func.func @transform_1(%arg0: i32, %arg1: i32, %arg2: i32) -> (i32, i32, i32) {
    %c1_i32 = arith.constant 1 : i32
    %0 = arith.muli %arg0, %c1_i32 : i32
    %1 = arith.addi %0, %arg2 : i32
    %c0_i32 = arith.constant 0 : i32
    %c0_i32_0 = arith.constant 0 : i32
    return %arg1, %c0_i32, %1 : i32, i32, i32
  }
  func.func @transform_2(%arg0: i32, %arg1: i32, %arg2: i32) -> (i32, i32, i32, i32) {
    %c0_i32 = arith.constant 0 : i32
    %c0_i32_0 = arith.constant 0 : i32
    %c0_i32_1 = arith.constant 0 : i32
    return %arg0, %arg1, %c0_i32, %c0_i32_0 : i32, i32, i32, i32
  }
  func.func @transform_3(%arg0: i32, %arg1: i32, %arg2: i32) -> (i32, i32, i32, i32) {
    %c0_i32 = arith.constant 0 : i32
    %c0_i32_0 = arith.constant 0 : i32
    %c0_i32_1 = arith.constant 0 : i32
    return %arg0, %arg1, %c0_i32, %c0_i32_0 : i32, i32, i32, i32
  }
}

</mosaic_0001>

<llo_original>
// kernel: cross_entropy_loss_2d.1
$region0: #{cross_entropy_loss_2d.1}
  #allocation0 [shape = 'u32[]', space=smem, size = 0x4, offset = 0x4, fixed_abs, tag = 'smem constant byte address 0x4 - core index']
  #allocation1 [shape = 'u32[144,128]{1,0:T(1,128)}', space=vmem, size = 0x12000, scoped, tag = 'internal scratch']
  #allocation2 [shape = 'f32[1,1]{1,0:T(1,128)}', space=vmem, size = 0x200, scoped, tag = 'scratch operand']
  #allocation3 [shape = 'f32[1,1]{1,0:T(1,128)}', space=vmem, size = 0x200, scoped, tag = 'scratch operand']
  %s0 = inlined_call_operand.vmem [shape: f32[2,4,256], index: 0, kind: input, shape index: {}]
  %s1 = inlined_call_operand.vmem [shape: s32[2,1,256], index: 1, kind: input, shape index: {}]
  %s2 = inlined_call_operand.vmem [shape: f32[1,2,1,1], index: 2, kind: output, shape index: {0}]
  %s3 = inlined_call_operand.vmem [shape: f32[1,2,1,1], index: 3, kind: output, shape index: {1}]
  %4 = xla_tuple %s2, %s3
  %s5 = sld [smem:[#allocation0]]
  $region57: #{cross_entropy_loss_2d.1} parent=0
    _
  %s7 = ssub.s32 1, %s5
  %s8 = scalar_select 0, %s7, %s5
  loop: start=0, step=1, limit=4
  $region2: #{cross_entropy_loss_2d.1} parent=0 // loop_pre_header
    _
  $region3: #{cross_entropy_loss_2d.1} parent=0 // loop_header
    %s10 = sphi 0, %s14
    %p11 = scmp.ge.s32.totalorder %s10, 4
    %s17 = sphi 0, %s36
    %s18 = sphi 0, %s32
    %s19 = sphi 0, %s28
    %s20 = sphi 0, %s17
    %s21 = sphi 0, %s18
    %s22 = sphi 0, %s19
    %s23 = sphi 0, %s20
    %s24 = sphi 0, %s21
    %s25 = sphi 0, %s22
    %s43 = sphi 0, %s45
    %s46 = sphi 0, %s43
    %s47 = sphi 0, %s46
    %s63 = sphi 0, %s47
    %s73 = sphi 0, %s75
    %s76 = sphi 0, %s73
    %s77 = sphi 0, %s76
    %s93 = sphi 0, %s77
    %s101 = sphi 0, %s103
    %s104 = sphi 0, %s101
    %s105 = sphi 0, %s104
    %s121 = sphi 0, %s105
    %s129 = sphi 0, %s131
    %s132 = sphi 0, %s129
    %s133 = sphi 0, %s132
    %s149 = sphi 0, %s133
  $region4: #{cross_entropy_loss_2d.1} parent=0 // loop_header_branch
    %13 = sbr.rel (%p11) target = $region8
  $region5: #{cross_entropy_loss_2d.1} parent=0 // loop_body
    %s15 = ssub.s32 %s10, 1
    %s16 = ssub.s32 %s10, 2
    %s26 = sadd.s32 1, %s19
    %p27 = scmp.ge.s32.totalorder %s26, 1
    %s28 = scalar_select %p27, 0, %s26
    %s29 = sadd.s32 1, %s18
    %s30 = scalar_select %p27, %s29, %s18
    %p31 = scmp.ge.s32.totalorder %s30, 2
    %s32 = scalar_select %p31, 0, %s30
    %s33 = sadd.s32 1, %s17
    %s34 = scalar_select %p31, %s33, %s17
    %p35 = scmp.ge.s32.totalorder %s34, 1
    %s36 = scalar_select %p35, 0, %s34
    %s37 = sadd.s32 %s17, %s19
    %s38 = sadd.s32 %s36, %s28
    %s39 = ssub.s32 %s18, %s32
    %s40 = ssub.s32 %s37, %s38
    %s41 = sor.u32 %s39, %s40
    %p42 = scmp.eq.s32.totalorder %s41, 0
    %s44 = sadd.s32 %s43, 1
    %s45 = scalar_select %p42, %s43, %s44
    %p48 = pneg %p42
    %p49 = scmp.eq.s32.totalorder %s10, 1
    %p50 = por %p48, %p49
    %p51 = scmp.ne.s32.totalorder %s43, %s46
    %p52 = scmp.eq.s32.totalorder %s10, 0
    %p53 = por %p51, %p52
    %p54 = scmp.ne.s32.totalorder %s43, %s46
    %p55 = scmp.eq.s32.totalorder %s15, 1
    %p56 = por %p54, %p55
    %p57 = scmp.ne.s32.totalorder %s46, %s47
    %p58 = scmp.eq.s32.totalorder %s15, 0
    %p59 = por %p57, %p58
    %p60 = scmp.ne.s32.totalorder %s46, %s47
    %p61 = scmp.eq.s32.totalorder %s16, 1
    %p62 = por %p60, %p61
    %p64 = scmp.ne.s32.totalorder %s47, %s63
    %p65 = scmp.eq.s32.totalorder %s16, 0
    %p66 = por %p64, %p65
    %s67 = sadd.s32 %s17, %s19
    %s68 = sadd.s32 %s36, %s28
    %s69 = ssub.s32 %s18, %s32
    %s70 = ssub.s32 %s67, %s68
    %s71 = sor.u32 %s69, %s70
    %p72 = scmp.eq.s32.totalorder %s71, 0
    %s74 = sadd.s32 %s73, 1
    %s75 = scalar_select %p72, %s73, %s74
    %p78 = pneg %p72
    %p79 = scmp.eq.s32.totalorder %s10, 1
    %p80 = por %p78, %p79
    %p81 = scmp.ne.s32.totalorder %s73, %s76
    %p82 = scmp.eq.s32.totalorder %s10, 0
    %p83 = por %p81, %p82
    %p84 = scmp.ne.s32.totalorder %s73, %s76
    %p85 = scmp.eq.s32.totalorder %s15, 1
    %p86 = por %p84, %p85
    %p87 = scmp.ne.s32.totalorder %s76, %s77
    %p88 = scmp.eq.s32.totalorder %s15, 0
    %p89 = por %p87, %p88
    %p90 = scmp.ne.s32.totalorder %s76, %s77
    %p91 = scmp.eq.s32.totalorder %s16, 1
    %p92 = por %p90, %p91
    %p94 = scmp.ne.s32.totalorder %s77, %s93
    %p95 = scmp.eq.s32.totalorder %s16, 0
    %p96 = por %p94, %p95
    %s97 = ssub.s32 %s17, %s36
    %s98 = ssub.s32 %s18, %s32
    %s99 = sor.u32 %s97, %s98
    %p100 = scmp.eq.s32.totalorder %s99, 0
    %s102 = sadd.s32 %s101, 1
    %s103 = scalar_select %p100, %s101, %s102
    %p106 = pneg %p100
    %p107 = scmp.eq.s32.totalorder %s10, 1
    %p108 = por %p106, %p107
    %p109 = scmp.ne.s32.totalorder %s101, %s104
    %p110 = scmp.eq.s32.totalorder %s10, 0
    %p111 = por %p109, %p110
    %p112 = scmp.ne.s32.totalorder %s101, %s104
    %p113 = scmp.eq.s32.totalorder %s15, 1
    %p114 = por %p112, %p113
    %p115 = scmp.ne.s32.totalorder %s104, %s105
    %p116 = scmp.eq.s32.totalorder %s15, 0
    %p117 = por %p115, %p116
    %p118 = scmp.ne.s32.totalorder %s104, %s105
    %p119 = scmp.eq.s32.totalorder %s16, 1
    %p120 = por %p118, %p119
    %p122 = scmp.ne.s32.totalorder %s105, %s121
    %p123 = scmp.eq.s32.totalorder %s16, 0
    %p124 = por %p122, %p123
    %s125 = ssub.s32 %s17, %s36
    %s126 = ssub.s32 %s18, %s32
    %s127 = sor.u32 %s125, %s126
    %p128 = scmp.eq.s32.totalorder %s127, 0
    %s130 = sadd.s32 %s129, 1
    %s131 = scalar_select %p128, %s129, %s130
    %p134 = pneg %p128
    %p135 = scmp.eq.s32.totalorder %s10, 1
    %p136 = por %p134, %p135
    %p137 = scmp.ne.s32.totalorder %s129, %s132
    %p138 = scmp.eq.s32.totalorder %s10, 0
    %p139 = por %p137, %p138
    %p140 = scmp.ne.s32.totalorder %s129, %s132
    %p141 = scmp.eq.s32.totalorder %s15, 1
    %p142 = por %p140, %p141
    %p143 = scmp.ne.s32.totalorder %s132, %s133
    %p144 = scmp.eq.s32.totalorder %s15, 0
    %p145 = por %p143, %p144
    %p146 = scmp.ne.s32.totalorder %s132, %s133
    %p147 = scmp.eq.s32.totalorder %s16, 1
    %p148 = por %p146, %p147
    %p150 = scmp.ne.s32.totalorder %s133, %s149
    %p151 = scmp.eq.s32.totalorder %s16, 0
    %p152 = por %p150, %p151
    %p153 = scmp.le.s32.totalorder 1, %s10
    %p154 = scmp.lt.s32.totalorder %s10, 3
    %p155 = pnand %p153, %p154
    %p156 = pneg %p155
    // Predicated region
    $region9: #{cross_entropy_loss_2d.1} parent=5 // pred_check
      _
    $region10: #{cross_entropy_loss_2d.1} parent=5 // pred_check_branch
      %158 = sbr.rel (%p155) target = $region12
    $region11: #{cross_entropy_loss_2d.1} parent=5 // pred_region
      %s159 = ssub.s32 %s10, 1
    $region12: #{cross_entropy_loss_2d.1} parent=5 // pred_fallthru
      _
    %p160 = scmp.lt.s32.totalorder %s10, 2
    // Predicated region
    $region13: #{cross_entropy_loss_2d.1} parent=5 // pred_check
      %p161 = pneg %p160
    $region14: #{cross_entropy_loss_2d.1} parent=5 // pred_check_branch
      %163 = sbr.rel (%p161) target = $region16
    $region15: #{cross_entropy_loss_2d.1} parent=5 // pred_region
      // Predicated region
      $region17: #{cross_entropy_loss_2d.1} parent=15 // pred_check
        %p164 = pneg %p53
      $region18: #{cross_entropy_loss_2d.1} parent=15 // pred_check_branch
        %166 = sbr.rel (%p164) target = $region20
      $region19: #{cross_entropy_loss_2d.1} parent=15 // pred_region
        %s167 = sadd.s32 %s17, %s19
        %s168 = smul.u32 2, %s167
        %p169 = scmp.lt.s32.totalorder %s18, 1
        %s170 = scalar_select %p169, %s18, 1
        %p171 = scmp.lt.s32.totalorder %s168, 1
        %s172 = scalar_select %p171, %s168, 1
        %s173 = smul.addr %s170, 2
        %s174 = sadd.s32 %s172, %s173
        %s175 = smul.addr %s174, 4
        %s176 = scalar_lea.vmem %s0, %s175
        %s177 = sadd.s32 %s17, %s19
        %s178 = smul.u32 2, %s177
      $region20: #{cross_entropy_loss_2d.1} parent=15 // pred_fallthru
        _
      // Predicated region
      $region21: #{cross_entropy_loss_2d.1} parent=15 // pred_check
        %p179 = pneg %p83
      $region22: #{cross_entropy_loss_2d.1} parent=15 // pred_check_branch
        %181 = sbr.rel (%p179) target = $region24
      $region23: #{cross_entropy_loss_2d.1} parent=15 // pred_region
        %s182 = sadd.s32 %s17, %s19
        %s183 = smul.u32 2, %s182
        %p184 = scmp.lt.s32.totalorder %s18, 1
        %s185 = scalar_select %p184, %s18, 1
        %p186 = scmp.lt.s32.totalorder %s183, 1
        %s187 = scalar_select %p186, %s183, 1
        %s188 = smul.addr %s185, 2
        %s189 = sadd.s32 %s187, %s188
        %s190 = scalar_lea.vmem %s1, %s189
        %s191 = sadd.s32 %s17, %s19
        %s192 = smul.u32 2, %s191
      $region24: #{cross_entropy_loss_2d.1} parent=15 // pred_fallthru
        _
    $region16: #{cross_entropy_loss_2d.1} parent=5 // pred_fallthru
      _
    %p193 = scmp.le.s32.totalorder 1, %s10
    %p194 = scmp.lt.s32.totalorder %s10, 3
    %p195 = pnand %p193, %p194
    %p196 = pneg %p195
    // Predicated region
    $region25: #{cross_entropy_loss_2d.1} parent=5 // pred_check
      _
    $region26: #{cross_entropy_loss_2d.1} parent=5 // pred_check_branch
      %198 = sbr.rel (%p195) target = $region28
    $region27: #{cross_entropy_loss_2d.1} parent=5 // pred_region
      %s199 = ssub.s32 %s10, 1
      %s200 = sadd.s32 %s20, %s22
      %s201 = smul.u32 2, %s200
      %p202 = scmp.lt.s32.totalorder %s21, 1
      %s203 = scalar_select %p202, %s21, 1
      %p204 = scmp.lt.s32.totalorder %s201, 1
      %s205 = scalar_select %p204, %s201, 1
      %s206 = smul.addr %s203, 2
      %s207 = sadd.s32 %s205, %s206
      %s208 = smul.addr %s207, 4
      %s209 = scalar_lea.vmem %s0, %s208
      %p210 = pneg %p59
      %p211 = pneg %p56
      %s212 = sadd.s32 %s20, %s22
      %s213 = smul.u32 2, %s212
      %p214 = scmp.lt.s32.totalorder %s21, 1
      %s215 = scalar_select %p214, %s21, 1
      %p216 = scmp.lt.s32.totalorder %s213, 1
      %s217 = scalar_select %p216, %s213, 1
      %s218 = smul.addr %s215, 2
      %s219 = sadd.s32 %s217, %s218
      %s220 = scalar_lea.vmem %s1, %s219
      %p221 = pneg %p89
      %p222 = pneg %p86
      %p223 = pneg %p117
      %p224 = pneg %p114
      %p225 = scmp.lt.s32.totalorder %s20, 0
      %s226 = scalar_select %p225, %s20, 0
      %p227 = scmp.lt.s32.totalorder %s21, 1
      %s228 = scalar_select %p227, %s21, 1
      %s229 = smul.addr %s226, 2
      %s230 = sadd.s32 %s228, %s229
      %s231 = scalar_lea.vmem %s2, %s230
      %p232 = pneg %p145
      %p233 = pneg %p142
      %p234 = scmp.lt.s32.totalorder %s20, 0
      %s235 = scalar_select %p234, %s20, 0
      %p236 = scmp.lt.s32.totalorder %s21, 1
      %s237 = scalar_select %p236, %s21, 1
      %s238 = smul.addr %s235, 2
      %s239 = sadd.s32 %s237, %s238
      %s240 = scalar_lea.vmem %s3, %s239
      %s241 = sadd.s32 %s20, %s22
      %s242 = smul.u32 2, %s241
      %p243 = scmp.lt.s32.totalorder %s21, 1
      %s244 = scalar_select %p243, %s21, 1
      %p245 = scmp.lt.s32.totalorder %s242, 1
      %s246 = scalar_select %p245, %s242, 1
      %s247 = smul.addr %s244, 2
      %s248 = sadd.s32 %s246, %s247
      %s249 = smul.addr %s248, 4
      %s250 = scalar_lea.vmem %s0, %s249
      %s251 = sadd.s32 %s20, %s22
      %s252 = smul.u32 2, %s251
      %s253 = sadd.s32 %s20, %s22
      %s254 = smul.u32 2, %s253
      %p255 = scmp.lt.s32.totalorder %s21, 1
      %s256 = scalar_select %p255, %s21, 1
      %p257 = scmp.lt.s32.totalorder %s254, 1
      %s258 = scalar_select %p257, %s254, 1
      %s259 = smul.addr %s256, 2
      %s260 = sadd.s32 %s258, %s259
      %s261 = scalar_lea.vmem %s1, %s260
      %s262 = sadd.s32 %s20, %s22
      %s263 = smul.u32 2, %s262
      %p264 = scmp.lt.s32.totalorder %s20, 0
      %s265 = scalar_select %p264, %s20, 0
      %p266 = scmp.lt.s32.totalorder %s21, 1
      %s267 = scalar_select %p266, %s21, 1
      %s268 = smul.addr %s265, 2
      %s269 = sadd.s32 %s267, %s268
      %s270 = scalar_lea.vmem %s2, %s269
      %p271 = scmp.lt.s32.totalorder %s20, 0
      %s272 = scalar_select %p271, %s20, 0
      %p273 = scmp.lt.s32.totalorder %s21, 1
      %s274 = scalar_select %p273, %s21, 1
      %s275 = smul.addr %s272, 2
      %s276 = sadd.s32 %s274, %s275
      %s277 = scalar_lea.vmem %s3, %s276
      %p278 = scmp.eq.s32.totalorder %s22, 0
      // Predicated region
      $region29: #{cross_entropy_loss_2d.1} parent=27 // pred_check
        %p279 = pneg %p278
      $region30: #{cross_entropy_loss_2d.1} parent=27 // pred_check_branch
        %281 = sbr.rel (%p279) target = $region32
      $region31: #{cross_entropy_loss_2d.1} parent=27 // pred_region
        %vm282 = vcmask 0
        %283 = vst.msk [vmem:[#allocation2] sm:$0x1] %vm282, 0.0
        %284 = vst.msk [vmem:[#allocation3] sm:$0x1] %vm282, 0.0
      $region32: #{cross_entropy_loss_2d.1} parent=27 // pred_fallthru
        _
      %v285 = vld [vmem:[%s250] sm:$0xff]
      %v286 = vld [vmem:[%s261] sm:$0x3]
      %v288 = vcombine.high %v285, %v285
      %vm290 = vcmask 1043456
      %v291 = vsel %vm290, %v285, -inf
      %v292 = vrot.slane %v291, 4
      %v293 = vmax.f32 %v291, %v292
      %v294 = vrot.slane %v293, 2
      %v295 = vmax.f32 %v293, %v294
      %v296 = vrot.slane %v295, 1
      %v297 = vmax.f32 %v295, %v296
      %v298 = vsel %vm290, %v288, -inf
      %v299 = vrot.slane %v298, 4
      %v300 = vmax.f32 %v298, %v299
      %v301 = vrot.slane %v300, 2
      %v302 = vmax.f32 %v300, %v301
      %v303 = vrot.slane %v302, 1
      %v304 = vmax.f32 %v302, %v303
      %v307 = vcombine.low %v297, %v304
      %v309 = vsub.f32 %v285, %v307
      %v310 = vmul.f32 %v309, 1.442695
      %v311 = vpow.pop %v310
      %v313 = vcombine.high %v311, %v311
      %v315 = vsel %vm290, %v311, 0.0
      %v316 = vrot.slane %v315, 4
      %v317 = vadd.f32 %v315, %v316
      %v318 = vrot.slane %v317, 2
      %v319 = vadd.f32 %v317, %v318
      %v320 = vrot.slane %v319, 1
      %v321 = vadd.f32 %v319, %v320
      %v322 = vsel %vm290, %v313, 0.0
      %v323 = vrot.slane %v322, 4
      %v324 = vadd.f32 %v322, %v323
      %v325 = vrot.slane %v324, 2
      %v326 = vadd.f32 %v324, %v325
      %v327 = vrot.slane %v326, 1
      %v328 = vadd.f32 %v326, %v327
      %v329 = vlog2.pop %v321
      %v330 = vmul.f32 %v329, 0.6931472
      %v331 = vlog2.pop %v328
      %v332 = vmul.f32 %v331, 0.6931472
      %v333 = vadd.f32 %v330, %v297
      %v334 = vadd.f32 %v332, %v304
      %v335 = vlaneseq
      %v336 = vshrl.u32 %v335, 7
      %v337 = vlaneseq
      %v338 = vshrl.u32 %v337, 7
      %v339 = vsub.s32 0, %v338
      %v340 = vrot.slane %v286, %v339
      %v341 = vlaneseq
      %v342 = vshrl.u32 %v341, 7
      %v343 = vsub.s32 1, %v342
      %v344 = vrot.slane %v286, %v343
      %vm345 = vcmp.eq.s32.totalorder %v336, %v340
      %vm346 = vcmp.eq.s32.totalorder %v336, %v344
      %v347 = vsel %vm345, %v285, 0.0
      %v348 = vsel %vm346, %v288, 0.0
      %v349 = vsel %vm290, %v347, 0.0
      %v350 = vrot.slane %v349, 4
      %v351 = vadd.f32 %v349, %v350
      %v352 = vrot.slane %v351, 2
      %v353 = vadd.f32 %v351, %v352
      %v354 = vrot.slane %v353, 1
      %v355 = vadd.f32 %v353, %v354
      %v356 = vsel %vm290, %v348, 0.0
      %v357 = vrot.slane %v356, 4
      %v358 = vadd.f32 %v356, %v357
      %v359 = vrot.slane %v358, 2
      %v360 = vadd.f32 %v358, %v359
      %v361 = vrot.slane %v360, 1
      %v362 = vadd.f32 %v360, %v361
      %s363 = sadd.s32 %s20, %s22
      %s364 = smul.u32 %s363, 256
      %s365 = ssub.s32 256, %s364
      %v366 = vlaneseq
      %v367 = vand.u32 %v366, 127
      %v368 = vadd.s32 %v367, 128
      %vm369 = vcmp.ge.s32.totalorder %v286, 0
      %v370 = vstv %s365
      %vm371 = vcmp.lt.s32.totalorder %v367, %v370
      %vm372 = vcmp.lt.s32.totalorder %v368, %v370
      %v373 = vsel %vm371, 1, 0
      %v374 = vsel %vm372, 1, 0
      %v375 = vcombine.low %v373, %v374
      %v377 = vunpack.c.l.s4 1966171168
      %v378 = vunpack.c.0.s8 %v377
      %v379 = vlaneseq
      %v380 = vshrl.u32 %v379, 7
      %v381 = vsub.s32 %v378, %v380
      %v382 = vrot.slane %v375, %v381
      %v384 = vunpack.c.l.s4 1966171168
      %v385 = vunpack.c.0.s8 %v384
      %v386 = vlaneseq
      %v387 = vshrl.u32 %v386, 7
      %v388 = vsub.s32 %v385, %v387
      %v389 = vrot.slane %v382, %v388
      %vm390 = vcmp.ne.s32.totalorder %v389, 0
      %vm391 = vmand %vm369, %vm390
      %v392 = vsub.f32 %v355, %v333
      %v393 = vsub.f32 %v362, %v334
      %v396 = vcombine.low %v392, %v393
      %v398 = vunpack.c.l.s4 1966171168
      %v399 = vunpack.c.0.s8 %v398
      %v400 = vlaneseq
      %v401 = vshrl.u32 %v400, 7
      %v402 = vsub.s32 %v399, %v401
      %v403 = vrot.slane %v396, %v402
      %v405 = vunpack.c.l.s4 1966171168
      %v406 = vunpack.c.0.s8 %v405
      %v407 = vlaneseq
      %v408 = vshrl.u32 %v407, 7
      %v409 = vsub.s32 %v406, %v408
      %v410 = vrot.slane %v403, %v409
      %v412 = vsel %vm391, %v410, 0.0
      %v413 = vld [vmem:[#allocation2] sm:$0x1]
      %v415 = vlaneseq
      %v416 = vshrl.u32 %v415, 7
      %v417 = vsub.s32 0, %v416
      %v418 = vrot.slane %v412, %v417
      %v419 = vlaneseq
      %v420 = vshrl.u32 %v419, 7
      %v421 = vsub.s32 1, %v420
      %v422 = vrot.slane %v412, %v421
      %vm425 = vcmask 1040384
      %v426 = vsel %vm425, %v418, 0.0
      %v427 = vsel %vm425, %v422, 0.0
      %v428 = vadd.f32 %v426, %v427
      %429 = vadd.xlane.f32.xlu0 %v428
      %v430 = vpop.xlane.xlu0 %429
      %v431 = vadd.f32 %v413, %v430
      %vm432 = vcmask 0
      %433 = vst.msk [vmem:[#allocation2] sm:$0x1] %vm432, %v431
      %v434 = vld [vmem:[#allocation3] sm:$0x1]
      %v435 = vsel %vm391, 1, 0
      %v436 = vcvt.s32.f32 %v435
      %v438 = vlaneseq
      %v439 = vshrl.u32 %v438, 7
      %v440 = vsub.s32 0, %v439
      %v441 = vrot.slane %v436, %v440
      %v442 = vlaneseq
      %v443 = vshrl.u32 %v442, 7
      %v444 = vsub.s32 1, %v443
      %v445 = vrot.slane %v436, %v444
      %v448 = vsel %vm425, %v441, 0.0
      %v449 = vsel %vm425, %v445, 0.0
      %v450 = vadd.f32 %v448, %v449
      %451 = vadd.xlane.f32.xlu0 %v450
      %v452 = vpop.xlane.xlu0 %451
      %v453 = vadd.f32 %v434, %v452
      %454 = vst.msk [vmem:[#allocation3] sm:$0x1] %vm432, %v453
      // Predicated region
      $region33: #{cross_entropy_loss_2d.1} parent=27 // pred_check
        %p455 = pneg %p278
      $region34: #{cross_entropy_loss_2d.1} parent=27 // pred_check_branch
        %457 = sbr.rel (%p455) target = $region36
      $region35: #{cross_entropy_loss_2d.1} parent=27 // pred_region
        %v458 = vld [vmem:[#allocation2] sm:$0x1]
        %459 = vst.msk [vmem:[%s270] sm:$0x1] %vm432, %v458
        %v460 = vld [vmem:[#allocation3] sm:$0x1]
        %461 = vst.msk [vmem:[%s277] sm:$0x1] %vm432, %v460
      $region36: #{cross_entropy_loss_2d.1} parent=27 // pred_fallthru
        _
      %p462 = scmp.lt.s32.totalorder %s20, 0
      %s463 = scalar_select %p462, %s20, 0
      %p464 = scmp.lt.s32.totalorder %s21, 1
      %s465 = scalar_select %p464, %s21, 1
      %s466 = smul.addr %s463, 2
      %s467 = sadd.s32 %s465, %s466
      %s468 = scalar_lea.vmem %s2, %s467
      %p469 = scmp.lt.s32.totalorder %s20, 0
      %s470 = scalar_select %p469, %s20, 0
      %p471 = scmp.lt.s32.totalorder %s21, 1
      %s472 = scalar_select %p471, %s21, 1
      %s473 = smul.addr %s470, 2
      %s474 = sadd.s32 %s472, %s473
      %s475 = scalar_lea.vmem %s3, %s474
      // Predicated region
      $region37: #{cross_entropy_loss_2d.1} parent=27 // pred_check
        %p476 = pneg %p114
      $region38: #{cross_entropy_loss_2d.1} parent=27 // pred_check_branch
        %478 = sbr.rel (%p476) target = $region40
      $region39: #{cross_entropy_loss_2d.1} parent=27 // pred_region
        _
      $region40: #{cross_entropy_loss_2d.1} parent=27 // pred_fallthru
        _
      // Predicated region
      $region41: #{cross_entropy_loss_2d.1} parent=27 // pred_check
        %p479 = pneg %p142
      $region42: #{cross_entropy_loss_2d.1} parent=27 // pred_check_branch
        %481 = sbr.rel (%p479) target = $region44
      $region43: #{cross_entropy_loss_2d.1} parent=27 // pred_region
        _
      $region44: #{cross_entropy_loss_2d.1} parent=27 // pred_fallthru
        _
    $region28: #{cross_entropy_loss_2d.1} parent=5 // pred_fallthru
      _
    %p482 = scmp.le.s32.totalorder 2, %s10
    // Predicated region
    $region45: #{cross_entropy_loss_2d.1} parent=5 // pred_check
      %p483 = pneg %p482
    $region46: #{cross_entropy_loss_2d.1} parent=5 // pred_check_branch
      %485 = sbr.rel (%p483) target = $region48
    $region47: #{cross_entropy_loss_2d.1} parent=5 // pred_region
      %s486 = ssub.s32 %s10, 2
      // Predicated region
      $region49: #{cross_entropy_loss_2d.1} parent=47 // pred_check
        %p487 = pneg %p120
      $region50: #{cross_entropy_loss_2d.1} parent=47 // pred_check_branch
        %489 = sbr.rel (%p487) target = $region52
      $region51: #{cross_entropy_loss_2d.1} parent=47 // pred_region
        %p490 = scmp.lt.s32.totalorder %s23, 0
        %s491 = scalar_select %p490, %s23, 0
        %p492 = scmp.lt.s32.totalorder %s24, 1
        %s493 = scalar_select %p492, %s24, 1
        %s494 = smul.addr %s491, 2
        %s495 = sadd.s32 %s493, %s494
        %s496 = scalar_lea.vmem %s2, %s495
      $region52: #{cross_entropy_loss_2d.1} parent=47 // pred_fallthru
        _
      // Predicated region
      $region53: #{cross_entropy_loss_2d.1} parent=47 // pred_check
        %p497 = pneg %p148
      $region54: #{cross_entropy_loss_2d.1} parent=47 // pred_check_branch
        %499 = sbr.rel (%p497) target = $region56
      $region55: #{cross_entropy_loss_2d.1} parent=47 // pred_region
        %p500 = scmp.lt.s32.totalorder %s23, 0
        %s501 = scalar_select %p500, %s23, 0
        %p502 = scmp.lt.s32.totalorder %s24, 1
        %s503 = scalar_select %p502, %s24, 1
        %s504 = smul.addr %s501, 2
        %s505 = sadd.s32 %s503, %s504
        %s506 = scalar_lea.vmem %s3, %s505
      $region56: #{cross_entropy_loss_2d.1} parent=47 // pred_fallthru
        _
    $region48: #{cross_entropy_loss_2d.1} parent=5 // pred_fallthru
      _
  $region6: #{cross_entropy_loss_2d.1} parent=0 // loop_footer
    %s14 = sadd.s32 1, %s10
  $region7: #{cross_entropy_loss_2d.1} parent=0 // loop_footer_branch
    %9 = sbr.rel target = $region3
  $region8: #{cross_entropy_loss_2d.1} parent=0 // loop_exit
    _

</llo_original>
